<compile_context>
chip_gen: v6e
topology: v6e:2x2x1
jax: 0.10.0
libtpu: 0.0.40
codegen_flags: <defaults>
</compile_context>

<pallas_src>
import functools

import jax
import jax.numpy as jnp
from jax import lax
from jax.experimental import pallas as pl
from jax.experimental.pallas import tpu as pltpu


def _res_module_kernel(H, W, x_ref, w1_ref, b1_ref, w2_ref, b2_ref, o_ref):
    """One image per grid step.

    x_ref : (1, C, H*W)  f32   input image, spatial flattened onto lanes
    w*_ref: (C, 9*C)     bf16  conv weights, column index = (kh*3+kw)*C + cin
    b*_ref: (C, 1)       f32   conv bias (broadcasts over lanes)
    o_ref : (1, C, H*W)  f32   output image
    """
    C = o_ref.shape[1]
    HW = H * W

    x = x_ref[0]                                              # (C, HW) f32

    # w-coordinate of every lane; used to kill taps that wrap across a row.
    col = lax.broadcasted_iota(jnp.int32, (C, HW), 1) % W
    left_edge = col == 0
    right_edge = col == (W - 1)

    def im2col(img):
        """img: (C, HW) bf16 -> (9*C, HW) bf16 patch matrix (tap-major rows).

        A 3x3 tap shift (dh, dw) is a shift by d = dh*W + dw along the
        flattened spatial axis.  Out-of-image rows are handled by the zero
        fill of the lane-axis slice; columns that wrapped across a row edge
        are masked explicitly.  No padded scratch buffer is needed.
        """
        taps = []
        for dh in (-1, 0, 1):
            for dw in (-1, 0, 1):
                d = dh * W + dw
                if d > 0:
                    s = jnp.concatenate(
                        [img[:, d:], jnp.zeros((C, d), img.dtype)], axis=1)
                elif d < 0:
                    s = jnp.concatenate(
                        [jnp.zeros((C, -d), img.dtype), img[:, :HW + d]],
                        axis=1)
                else:
                    s = img
                if dw == 1:
                    s = jnp.where(right_edge, jnp.zeros_like(s), s)
                elif dw == -1:
                    s = jnp.where(left_edge, jnp.zeros_like(s), s)
                taps.append(s)
        return jnp.concatenate(taps, axis=0)                  # (9C, HW)

    def conv3x3(img_bf16, w_ref, b_ref):
        # Single MXU matmul per conv: (C, 9C) @ (9C, HW) -> (C, HW).
        # bf16 operands, f32 accumulation, lane-dense output.
        patches = im2col(img_bf16)
        acc = jnp.dot(w_ref[...], patches,
                      preferred_element_type=jnp.float32)
        return acc + b_ref[...]

    y1 = conv3x3(x.astype(jnp.bfloat16), w1_ref, b1_ref)
    act = jnp.maximum(y1, 0.1 * y1)                           # LeakyReLU(0.1)
    y2 = conv3x3(act.astype(jnp.bfloat16), w2_ref, b2_ref)

    # Residual add in f32, single cast at the end.
    o_ref[0] = (x + y2).astype(o_ref.dtype)


def res_module_pallas(x_nchw, w1, b1, w2, b2):
    """x_nchw: (B, C, H, W) f32; w*: (C, C, 3, 3); b*: (C,). Returns NCHW f32."""
    B, C, H, W = x_nchw.shape
    HW = H * W

    x_flat = x_nchw.reshape(B, C, HW).astype(jnp.float32)

    def pack_w(w):
        # (cout, cin, kh, kw) -> (cout, kh, kw, cin) -> (cout, 9*cin), bf16.
        return jnp.transpose(w, (0, 2, 3, 1)).reshape(C, 9 * C).astype(jnp.bfloat16)

    w1p, w2p = pack_w(w1), pack_w(w2)
    b1p = b1.reshape(C, 1).astype(jnp.float32)
    b2p = b2.reshape(C, 1).astype(jnp.float32)

    kernel = functools.partial(_res_module_kernel, H, W)

    out_flat = pl.pallas_call(
        kernel,
        out_shape=jax.ShapeDtypeStruct((B, C, HW), jnp.float32),
        grid=(B,),
        in_specs=[
            pl.BlockSpec((1, C, HW), lambda b: (b, 0, 0)),    # x (per image)
            pl.BlockSpec((C, 9 * C), lambda b: (0, 0)),       # w1 (resident)
            pl.BlockSpec((C, 1), lambda b: (0, 0)),           # b1
            pl.BlockSpec((C, 9 * C), lambda b: (0, 0)),       # w2
            pl.BlockSpec((C, 1), lambda b: (0, 0)),           # b2
        ],
        out_specs=pl.BlockSpec((1, C, HW), lambda b: (b, 0, 0)),
        compiler_params=pltpu.CompilerParams(
            dimension_semantics=("parallel",),                # megacore on v7x
            vmem_limit_bytes=32 * 1024 * 1024,                # safe on v5e/v6e/v7x
        ),
    )(x_flat, w1p, b1p, w2p, b2p)

    return out_flat.reshape(B, C, H, W)


def _reference(x, w1, b1, w2, b2):
    """Plain-JAX reference matching the PyTorch module.  Conv operands are
    rounded through bf16 (with f32 accumulation) to match the kernel's MXU
    precision; bias, activation and residual stay in f32."""
    rb = lambda a: a.astype(jnp.bfloat16).astype(jnp.float32)
    dn = lax.conv_dimension_numbers(x.shape, w1.shape, ("NCHW", "OIHW", "NCHW"))

    def conv(a, w):
        return lax.conv_general_dilated(rb(a), rb(w), (1, 1), ((1, 1), (1, 1)),
                                        dimension_numbers=dn)

    y = conv(x, w1) + b1[None, :, None, None]
    y = jnp.maximum(y, 0.1 * y)
    y = conv(y, w2) + b2[None, :, None, None]
    return x + y


if __name__ == "__main__":
    B, C, H, W = 2, 4, 16, 16

    key = jax.random.PRNGKey(0)
    kx, kw1, kb1, kw2, kb2 = jax.random.split(key, 5)

    x = jax.random.normal(kx, (B, C, H, W), dtype=jnp.float32)
    # Deterministic param init (scaled like PyTorch's default uniform fan-in init).
    fan_in = C * 3 * 3
    bound = 1.0 / jnp.sqrt(fan_in)
    w1 = jax.random.uniform(kw1, (C, C, 3, 3), jnp.float32, -bound, bound)
    b1 = jax.random.uniform(kb1, (C,), jnp.float32, -bound, bound)
    w2 = jax.random.uniform(kw2, (C, C, 3, 3), jnp.float32, -bound, bound)
    b2 = jax.random.uniform(kb2, (C,), jnp.float32, -bound, bound)

    out = jax.jit(res_module_pallas)(x, w1, b1, w2, b2)
    jax.block_until_ready(out)

    ref = _reference(x, w1, b1, w2, b2)
    assert out.shape == ref.shape == (B, C, H, W)
    assert jnp.allclose(out, ref, atol=1e-3, rtol=1e-3), \
        f"max abs err {jnp.max(jnp.abs(out - ref))}"

    print("KERNEL_OK")
</pallas_src>

<mosaic_0001>
module attributes {stable_mosaic.version = 11 : i64} {
  func.func @_res_module_kernel(%arg0: i32, %arg1: memref<1x4x256xf32, #tpu.memory_space<vmem>>, %arg2: memref<4x36xbf16, #tpu.memory_space<vmem>>, %arg3: memref<4x1xf32, #tpu.memory_space<vmem>>, %arg4: memref<4x36xbf16, #tpu.memory_space<vmem>>, %arg5: memref<4x1xf32, #tpu.memory_space<vmem>>, %arg6: memref<1x4x256xf32, #tpu.memory_space<vmem>>) attributes {dimension_semantics = [#tpu.dimension_semantics<parallel>], iteration_bounds = array<i64: 2>, scalar_prefetch = 0 : i64, scratch_operands = 0 : i64, tpu.core_type = #tpu.core_type<tc>, window_params = [{transform_indices = @transform_0, window_bounds = array<i64: 1, 4, 256>}, {pipeline_mode = #tpu.pipeline_mode<synchronous>, transform_indices = @transform_1, window_bounds = array<i64: 4, 36>}, {pipeline_mode = #tpu.pipeline_mode<synchronous>, transform_indices = @transform_2, window_bounds = array<i64: 4, 1>}, {pipeline_mode = #tpu.pipeline_mode<synchronous>, transform_indices = @transform_3, window_bounds = array<i64: 4, 36>}, {pipeline_mode = #tpu.pipeline_mode<synchronous>, transform_indices = @transform_4, window_bounds = array<i64: 4, 1>}, {transform_indices = @transform_5, window_bounds = array<i64: 1, 4, 256>}]} {
    %c0 = arith.constant 0 : index
    %c0_0 = arith.constant 0 : index
    %c0_1 = arith.constant 0 : index
    %0 = vector.load %arg1[%c0, %c0_0, %c0_1] : memref<1x4x256xf32, #tpu.memory_space<vmem>>, vector<1x4x256xf32>
    %1 = vector.shape_cast %0 : vector<1x4x256xf32> to vector<4x256xf32>
    %2 = tpu.iota {dimensions = array<i32: 1>} : vector<4x256xi32>
    %c16_i32 = arith.constant 16 : i32
    %c0_i32 = arith.constant 0 : i32
    %3 = arith.cmpi eq, %c16_i32, %c0_i32 : i32
    %c1_i32 = arith.constant 1 : i32
    %4 = arith.select %3, %c1_i32, %c16_i32 : i32
    %5 = vector.broadcast %4 : i32 to vector<4x256xi32>
    %6 = arith.remsi %2, %5 : vector<4x256xi32>
    %c0_i32_2 = arith.constant 0 : i32
    %7 = vector.broadcast %c0_i32_2 : i32 to vector<4x256xi32>
    %8 = arith.cmpi ne, %6, %7 : vector<4x256xi32>
    %c0_i32_3 = arith.constant 0 : i32
    %9 = vector.broadcast %c0_i32_3 : i32 to vector<4x256xi32>
    %10 = arith.cmpi slt, %6, %9 : vector<4x256xi32>
    %c0_i32_4 = arith.constant 0 : i32
    %11 = arith.cmpi slt, %4, %c0_i32_4 : i32
    %12 = vector.broadcast %11 : i1 to vector<4x256xi1>
    %13 = vector.broadcast %12 : vector<4x256xi1> to vector<4x256xi1>
    %14 = arith.xori %10, %13 : vector<4x256xi1>
    %15 = arith.andi %14, %8 : vector<4x256xi1>
    %16 = vector.broadcast %4 : i32 to vector<4x256xi32>
    %17 = arith.addi %6, %16 : vector<4x256xi32>
    %18 = arith.select %15, %17, %6 : vector<4x256xi1>, vector<4x256xi32>
    %c0_i32_5 = arith.constant 0 : i32
    %19 = vector.broadcast %c0_i32_5 : i32 to vector<4x256xi32>
    %20 = arith.cmpi eq, %18, %19 : vector<4x256xi32>
    %c15_i32 = arith.constant 15 : i32
    %21 = vector.broadcast %c15_i32 : i32 to vector<4x256xi32>
    %22 = arith.cmpi eq, %18, %21 : vector<4x256xi32>
    %23 = arith.truncf %1 : vector<4x256xf32> to vector<4x256xbf16>
    %cst = arith.constant 0.000000e+00 : bf16
    %24 = vector.broadcast %cst : bf16 to vector<4x17xbf16>
    %25 = vector.extract_strided_slice %23 {offsets = [0, 0], sizes = [4, 239], strides = [1, 1]} : vector<4x256xbf16> to vector<4x239xbf16>
    %26 = tpu.concatenate %24, %25 in 1 : vector<4x17xbf16>, vector<4x239xbf16> -> vector<4x256xbf16>
    %cst_6 = arith.constant 0.000000e+00 : bf16
    %27 = vector.broadcast %cst_6 : bf16 to vector<4x256xbf16>
    %28 = arith.select %20, %27, %26 : vector<4x256xi1>, vector<4x256xbf16>
    %cst_7 = arith.constant 0.000000e+00 : bf16
    %29 = vector.broadcast %cst_7 : bf16 to vector<4x16xbf16>
    %30 = vector.extract_strided_slice %23 {offsets = [0, 0], sizes = [4, 240], strides = [1, 1]} : vector<4x256xbf16> to vector<4x240xbf16>
    %31 = tpu.concatenate %29, %30 in 1 : vector<4x16xbf16>, vector<4x240xbf16> -> vector<4x256xbf16>
    %cst_8 = arith.constant 0.000000e+00 : bf16
    %32 = vector.broadcast %cst_8 : bf16 to vector<4x15xbf16>
    %33 = vector.extract_strided_slice %23 {offsets = [0, 0], sizes = [4, 241], strides = [1, 1]} : vector<4x256xbf16> to vector<4x241xbf16>
    %34 = tpu.concatenate %32, %33 in 1 : vector<4x15xbf16>, vector<4x241xbf16> -> vector<4x256xbf16>
    %cst_9 = arith.constant 0.000000e+00 : bf16
    %35 = vector.broadcast %cst_9 : bf16 to vector<4x256xbf16>
    %36 = arith.select %22, %35, %34 : vector<4x256xi1>, vector<4x256xbf16>
    %cst_10 = arith.constant 0.000000e+00 : bf16
    %37 = vector.broadcast %cst_10 : bf16 to vector<4x1xbf16>
    %38 = vector.extract_strided_slice %23 {offsets = [0, 0], sizes = [4, 255], strides = [1, 1]} : vector<4x256xbf16> to vector<4x255xbf16>
    %39 = tpu.concatenate %37, %38 in 1 : vector<4x1xbf16>, vector<4x255xbf16> -> vector<4x256xbf16>
    %cst_11 = arith.constant 0.000000e+00 : bf16
    %40 = vector.broadcast %cst_11 : bf16 to vector<4x256xbf16>
    %41 = arith.select %20, %40, %39 : vector<4x256xi1>, vector<4x256xbf16>
    %42 = vector.extract_strided_slice %23 {offsets = [0, 1], sizes = [4, 255], strides = [1, 1]} : vector<4x256xbf16> to vector<4x255xbf16>
    %cst_12 = arith.constant 0.000000e+00 : bf16
    %43 = vector.broadcast %cst_12 : bf16 to vector<4x1xbf16>
    %44 = tpu.concatenate %42, %43 in 1 : vector<4x255xbf16>, vector<4x1xbf16> -> vector<4x256xbf16>
    %cst_13 = arith.constant 0.000000e+00 : bf16
    %45 = vector.broadcast %cst_13 : bf16 to vector<4x256xbf16>
    %46 = arith.select %22, %45, %44 : vector<4x256xi1>, vector<4x256xbf16>
    %47 = vector.extract_strided_slice %23 {offsets = [0, 15], sizes = [4, 241], strides = [1, 1]} : vector<4x256xbf16> to vector<4x241xbf16>
    %cst_14 = arith.constant 0.000000e+00 : bf16
    %48 = vector.broadcast %cst_14 : bf16 to vector<4x15xbf16>
    %49 = tpu.concatenate %47, %48 in 1 : vector<4x241xbf16>, vector<4x15xbf16> -> vector<4x256xbf16>
    %cst_15 = arith.constant 0.000000e+00 : bf16
    %50 = vector.broadcast %cst_15 : bf16 to vector<4x256xbf16>
    %51 = arith.select %20, %50, %49 : vector<4x256xi1>, vector<4x256xbf16>
    %52 = vector.extract_strided_slice %23 {offsets = [0, 16], sizes = [4, 240], strides = [1, 1]} : vector<4x256xbf16> to vector<4x240xbf16>
    %cst_16 = arith.constant 0.000000e+00 : bf16
    %53 = vector.broadcast %cst_16 : bf16 to vector<4x16xbf16>
    %54 = tpu.concatenate %52, %53 in 1 : vector<4x240xbf16>, vector<4x16xbf16> -> vector<4x256xbf16>
    %55 = vector.extract_strided_slice %23 {offsets = [0, 17], sizes = [4, 239], strides = [1, 1]} : vector<4x256xbf16> to vector<4x239xbf16>
    %cst_17 = arith.constant 0.000000e+00 : bf16
    %56 = vector.broadcast %cst_17 : bf16 to vector<4x17xbf16>
    %57 = tpu.concatenate %55, %56 in 1 : vector<4x239xbf16>, vector<4x17xbf16> -> vector<4x256xbf16>
    %cst_18 = arith.constant 0.000000e+00 : bf16
    %58 = vector.broadcast %cst_18 : bf16 to vector<4x256xbf16>
    %59 = arith.select %22, %58, %57 : vector<4x256xi1>, vector<4x256xbf16>
    %60 = tpu.concatenate %28, %31, %36, %41, %23, %46, %51, %54, %59 in 0 : vector<4x256xbf16>, vector<4x256xbf16>, vector<4x256xbf16>, vector<4x256xbf16>, vector<4x256xbf16>, vector<4x256xbf16>, vector<4x256xbf16>, vector<4x256xbf16>, vector<4x256xbf16> -> vector<36x256xbf16>
    %c0_19 = arith.constant 0 : index
    %c0_20 = arith.constant 0 : index
    %61 = vector.load %arg2[%c0_19, %c0_20] : memref<4x36xbf16, #tpu.memory_space<vmem>>, vector<4x36xbf16>
    %cst_21 = arith.constant dense<0.000000e+00> : vector<4x256xf32>
    %62 = tpu.matmul %61, %60, %cst_21 {dimension_numbers = #tpu.dot_dimension_numbers<[1], [0], [0], [1], [0, 0, 1, 1], [], []>} : vector<4x36xbf16>, vector<36x256xbf16>, vector<4x256xf32> -> vector<4x256xf32>
    %c0_22 = arith.constant 0 : index
    %c0_23 = arith.constant 0 : index
    %63 = vector.load %arg3[%c0_22, %c0_23] : memref<4x1xf32, #tpu.memory_space<vmem>>, vector<4x1xf32>
    %64 = vector.broadcast %63 : vector<4x1xf32> to vector<4x256xf32>
    %65 = arith.addf %62, %64 : vector<4x256xf32>
    %cst_24 = arith.constant 1.000000e-01 : f32
    %66 = vector.broadcast %cst_24 : f32 to vector<4x256xf32>
    %67 = arith.mulf %66, %65 : vector<4x256xf32>
    %68 = arith.maximumf %65, %67 : vector<4x256xf32>
    %69 = arith.truncf %68 : vector<4x256xf32> to vector<4x256xbf16>
    %cst_25 = arith.constant 0.000000e+00 : bf16
    %70 = vector.broadcast %cst_25 : bf16 to vector<4x17xbf16>
    %71 = vector.extract_strided_slice %69 {offsets = [0, 0], sizes = [4, 239], strides = [1, 1]} : vector<4x256xbf16> to vector<4x239xbf16>
    %72 = tpu.concatenate %70, %71 in 1 : vector<4x17xbf16>, vector<4x239xbf16> -> vector<4x256xbf16>
    %cst_26 = arith.constant 0.000000e+00 : bf16
    %73 = vector.broadcast %cst_26 : bf16 to vector<4x256xbf16>
    %74 = arith.select %20, %73, %72 : vector<4x256xi1>, vector<4x256xbf16>
    %cst_27 = arith.constant 0.000000e+00 : bf16
    %75 = vector.broadcast %cst_27 : bf16 to vector<4x16xbf16>
    %76 = vector.extract_strided_slice %69 {offsets = [0, 0], sizes = [4, 240], strides = [1, 1]} : vector<4x256xbf16> to vector<4x240xbf16>
    %77 = tpu.concatenate %75, %76 in 1 : vector<4x16xbf16>, vector<4x240xbf16> -> vector<4x256xbf16>
    %cst_28 = arith.constant 0.000000e+00 : bf16
    %78 = vector.broadcast %cst_28 : bf16 to vector<4x15xbf16>
    %79 = vector.extract_strided_slice %69 {offsets = [0, 0], sizes = [4, 241], strides = [1, 1]} : vector<4x256xbf16> to vector<4x241xbf16>
    %80 = tpu.concatenate %78, %79 in 1 : vector<4x15xbf16>, vector<4x241xbf16> -> vector<4x256xbf16>
    %cst_29 = arith.constant 0.000000e+00 : bf16
    %81 = vector.broadcast %cst_29 : bf16 to vector<4x256xbf16>
    %82 = arith.select %22, %81, %80 : vector<4x256xi1>, vector<4x256xbf16>
    %cst_30 = arith.constant 0.000000e+00 : bf16
    %83 = vector.broadcast %cst_30 : bf16 to vector<4x1xbf16>
    %84 = vector.extract_strided_slice %69 {offsets = [0, 0], sizes = [4, 255], strides = [1, 1]} : vector<4x256xbf16> to vector<4x255xbf16>
    %85 = tpu.concatenate %83, %84 in 1 : vector<4x1xbf16>, vector<4x255xbf16> -> vector<4x256xbf16>
    %cst_31 = arith.constant 0.000000e+00 : bf16
    %86 = vector.broadcast %cst_31 : bf16 to vector<4x256xbf16>
    %87 = arith.select %20, %86, %85 : vector<4x256xi1>, vector<4x256xbf16>
    %88 = vector.extract_strided_slice %69 {offsets = [0, 1], sizes = [4, 255], strides = [1, 1]} : vector<4x256xbf16> to vector<4x255xbf16>
    %cst_32 = arith.constant 0.000000e+00 : bf16
    %89 = vector.broadcast %cst_32 : bf16 to vector<4x1xbf16>
    %90 = tpu.concatenate %88, %89 in 1 : vector<4x255xbf16>, vector<4x1xbf16> -> vector<4x256xbf16>
    %cst_33 = arith.constant 0.000000e+00 : bf16
    %91 = vector.broadcast %cst_33 : bf16 to vector<4x256xbf16>
    %92 = arith.select %22, %91, %90 : vector<4x256xi1>, vector<4x256xbf16>
    %93 = vector.extract_strided_slice %69 {offsets = [0, 15], sizes = [4, 241], strides = [1, 1]} : vector<4x256xbf16> to vector<4x241xbf16>
    %cst_34 = arith.constant 0.000000e+00 : bf16
    %94 = vector.broadcast %cst_34 : bf16 to vector<4x15xbf16>
    %95 = tpu.concatenate %93, %94 in 1 : vector<4x241xbf16>, vector<4x15xbf16> -> vector<4x256xbf16>
    %cst_35 = arith.constant 0.000000e+00 : bf16
    %96 = vector.broadcast %cst_35 : bf16 to vector<4x256xbf16>
    %97 = arith.select %20, %96, %95 : vector<4x256xi1>, vector<4x256xbf16>
    %98 = vector.extract_strided_slice %69 {offsets = [0, 16], sizes = [4, 240], strides = [1, 1]} : vector<4x256xbf16> to vector<4x240xbf16>
    %cst_36 = arith.constant 0.000000e+00 : bf16
    %99 = vector.broadcast %cst_36 : bf16 to vector<4x16xbf16>
    %100 = tpu.concatenate %98, %99 in 1 : vector<4x240xbf16>, vector<4x16xbf16> -> vector<4x256xbf16>
    %101 = vector.extract_strided_slice %69 {offsets = [0, 17], sizes = [4, 239], strides = [1, 1]} : vector<4x256xbf16> to vector<4x239xbf16>
    %cst_37 = arith.constant 0.000000e+00 : bf16
    %102 = vector.broadcast %cst_37 : bf16 to vector<4x17xbf16>
    %103 = tpu.concatenate %101, %102 in 1 : vector<4x239xbf16>, vector<4x17xbf16> -> vector<4x256xbf16>
    %cst_38 = arith.constant 0.000000e+00 : bf16
    %104 = vector.broadcast %cst_38 : bf16 to vector<4x256xbf16>
    %105 = arith.select %22, %104, %103 : vector<4x256xi1>, vector<4x256xbf16>
    %106 = tpu.concatenate %74, %77, %82, %87, %69, %92, %97, %100, %105 in 0 : vector<4x256xbf16>, vector<4x256xbf16>, vector<4x256xbf16>, vector<4x256xbf16>, vector<4x256xbf16>, vector<4x256xbf16>, vector<4x256xbf16>, vector<4x256xbf16>, vector<4x256xbf16> -> vector<36x256xbf16>
    %c0_39 = arith.constant 0 : index
    %c0_40 = arith.constant 0 : index
    %107 = vector.load %arg4[%c0_39, %c0_40] : memref<4x36xbf16, #tpu.memory_space<vmem>>, vector<4x36xbf16>
    %cst_41 = arith.constant dense<0.000000e+00> : vector<4x256xf32>
    %108 = tpu.matmul %107, %106, %cst_41 {dimension_numbers = #tpu.dot_dimension_numbers<[1], [0], [0], [1], [0, 0, 1, 1], [], []>} : vector<4x36xbf16>, vector<36x256xbf16>, vector<4x256xf32> -> vector<4x256xf32>
    %c0_42 = arith.constant 0 : index
    %c0_43 = arith.constant 0 : index
    %109 = vector.load %arg5[%c0_42, %c0_43] : memref<4x1xf32, #tpu.memory_space<vmem>>, vector<4x1xf32>
    %110 = vector.broadcast %109 : vector<4x1xf32> to vector<4x256xf32>
    %111 = arith.addf %108, %110 : vector<4x256xf32>
    %112 = arith.addf %1, %111 : vector<4x256xf32>
    %c0_44 = arith.constant 0 : index
    %c0_45 = arith.constant 0 : index
    %c0_46 = arith.constant 0 : index
    %113 = vector.load %arg6[%c0_44, %c0_45, %c0_46] : memref<1x4x256xf32, #tpu.memory_space<vmem>>, vector<1x4x256xf32>
    %114 = vector.shape_cast %113 : vector<1x4x256xf32> to vector<4x256xf32>
    %115 = vector.shape_cast %112 : vector<4x256xf32> to vector<1x4x256xf32>
    tpu.vector_store %arg6[%c0_44, %c0_45, %c0_46], %115 {strides = array<i32>} : memref<1x4x256xf32, #tpu.memory_space<vmem>>, vector<1x4x256xf32>,
    return
  }
  func.func @transform_0(%arg0: i32) -> (i32, i32, i32) {
    %c0_i32 = arith.constant 0 : i32
    %c0_i32_0 = arith.constant 0 : i32
    %c0_i32_1 = arith.constant 0 : i32
    return %arg0, %c0_i32, %c0_i32_0 : i32, i32, i32
  }
  func.func @transform_1(%arg0: i32) -> (i32, i32) {
    %c0_i32 = arith.constant 0 : i32
    %c0_i32_0 = arith.constant 0 : i32
    %c0_i32_1 = arith.constant 0 : i32
    return %c0_i32, %c0_i32_0 : i32, i32
  }
  func.func @transform_2(%arg0: i32) -> (i32, i32) {
    %c0_i32 = arith.constant 0 : i32
    %c0_i32_0 = arith.constant 0 : i32
    %c0_i32_1 = arith.constant 0 : i32
    return %c0_i32, %c0_i32_0 : i32, i32
  }
  func.func @transform_3(%arg0: i32) -> (i32, i32) {
    %c0_i32 = arith.constant 0 : i32
    %c0_i32_0 = arith.constant 0 : i32
    %c0_i32_1 = arith.constant 0 : i32
    return %c0_i32, %c0_i32_0 : i32, i32
  }
  func.func @transform_4(%arg0: i32) -> (i32, i32) {
    %c0_i32 = arith.constant 0 : i32
    %c0_i32_0 = arith.constant 0 : i32
    %c0_i32_1 = arith.constant 0 : i32
    return %c0_i32, %c0_i32_0 : i32, i32
  }
  func.func @transform_5(%arg0: i32) -> (i32, i32, i32) {
    %c0_i32 = arith.constant 0 : i32
    %c0_i32_0 = arith.constant 0 : i32
    %c0_i32_1 = arith.constant 0 : i32
    return %arg0, %c0_i32, %c0_i32_0 : i32, i32, i32
  }
}

</mosaic_0001>

<llo_original>
// kernel: res_module_pallas.1
$region0: #{res_module_pallas.1}
  #allocation0 [shape = 'u32[]', space=smem, size = 0x4, offset = 0x4, fixed_abs, tag = 'smem constant byte address 0x4 - core index']
  #allocation1 [shape = 'u32[144,128]{1,0:T(1,128)}', space=vmem, size = 0x12000, scoped, tag = 'internal scratch']
  %s0 = inlined_call_operand.vmem [shape: f32[2,4,256], index: 0, kind: input, shape index: {}]
  %s1 = inlined_call_operand.vmem [shape: bf16[4,36], index: 1, kind: input, shape index: {}]
  %s2 = inlined_call_operand.vmem [shape: f32[4,1], index: 2, kind: input, shape index: {}]
  %s3 = inlined_call_operand.vmem [shape: bf16[4,36], index: 3, kind: input, shape index: {}]
  %s4 = inlined_call_operand.vmem [shape: f32[4,1], index: 4, kind: input, shape index: {}]
  %s5 = inlined_call_operand.vmem [shape: f32[2,4,256], index: 5, kind: output, shape index: {}]
  %s6 = sld [smem:[#allocation0]]
  $region53: #{res_module_pallas.1} parent=0
    _
  %s8 = ssub.s32 1, %s6
  %s9 = scalar_select 0, %s8, %s6
  loop: start=0, step=1, limit=4
  $region2: #{res_module_pallas.1} parent=0 // loop_pre_header
    _
  $region3: #{res_module_pallas.1} parent=0 // loop_header
    %s11 = sphi 0, %s15
    %p12 = scmp.ge.s32.totalorder %s11, 4
    %s21 = sphi 0, %s23
    %s24 = sphi 0, %s21
    %s25 = sphi 0, %s24
    %s41 = sphi 0, %s25
    %s45 = sphi 0, %s45
    %s47 = sphi 0, %s45
    %s48 = sphi 0, %s47
    %s62 = sphi 0, %s48
    %s66 = sphi 0, %s66
    %s68 = sphi 0, %s66
    %s69 = sphi 0, %s68
    %s83 = sphi 0, %s69
    %s87 = sphi 0, %s87
    %s89 = sphi 0, %s87
    %s90 = sphi 0, %s89
    %s104 = sphi 0, %s90
    %s108 = sphi 0, %s108
    %s110 = sphi 0, %s108
    %s111 = sphi 0, %s110
    %s125 = sphi 0, %s111
    %s131 = sphi 0, %s133
    %s134 = sphi 0, %s131
    %s135 = sphi 0, %s134
    %s151 = sphi 0, %s135
  $region4: #{res_module_pallas.1} parent=0 // loop_header_branch
    %14 = sbr.rel (%p12) target = $region8
  $region5: #{res_module_pallas.1} parent=0 // loop_body
    %s16 = ssub.s32 %s11, 1
    %s17 = ssub.s32 %s11, 2
    %s18 = sadd.s32 %s11, 1
    %s19 = ssub.s32 %s11, %s18
    %p20 = scmp.eq.s32.totalorder %s19, 0
    %s22 = sadd.s32 %s21, 1
    %s23 = scalar_select %p20, %s21, %s22
    %p26 = pneg %p20
    %p27 = scmp.eq.s32.totalorder %s11, 1
    %p28 = por %p26, %p27
    %p29 = scmp.ne.s32.totalorder %s21, %s24
    %p30 = scmp.eq.s32.totalorder %s11, 0
    %p31 = por %p29, %p30
    %p32 = scmp.ne.s32.totalorder %s21, %s24
    %p33 = scmp.eq.s32.totalorder %s16, 1
    %p34 = por %p32, %p33
    %p35 = scmp.ne.s32.totalorder %s24, %s25
    %p36 = scmp.eq.s32.totalorder %s16, 0
    %p37 = por %p35, %p36
    %p38 = scmp.ne.s32.totalorder %s24, %s25
    %p39 = scmp.eq.s32.totalorder %s17, 1
    %p40 = por %p38, %p39
    %p42 = scmp.ne.s32.totalorder %s25, %s41
    %p43 = scmp.eq.s32.totalorder %s17, 0
    %p44 = por %p42, %p43
    %s46 = sadd.s32 %s45, 1
    %p49 = scmp.eq.s32.totalorder %s11, 1
    %p50 = scmp.ne.s32.totalorder %s45, %s47
    %p51 = scmp.eq.s32.totalorder %s11, 0
    %p52 = por %p50, %p51
    %p53 = scmp.ne.s32.totalorder %s45, %s47
    %p54 = scmp.eq.s32.totalorder %s16, 1
    %p55 = por %p53, %p54
    %p56 = scmp.ne.s32.totalorder %s47, %s48
    %p57 = scmp.eq.s32.totalorder %s16, 0
    %p58 = por %p56, %p57
    %p59 = scmp.ne.s32.totalorder %s47, %s48
    %p60 = scmp.eq.s32.totalorder %s17, 1
    %p61 = por %p59, %p60
    %p63 = scmp.ne.s32.totalorder %s48, %s62
    %p64 = scmp.eq.s32.totalorder %s17, 0
    %p65 = por %p63, %p64
    %s67 = sadd.s32 %s66, 1
    %p70 = scmp.eq.s32.totalorder %s11, 1
    %p71 = scmp.ne.s32.totalorder %s66, %s68
    %p72 = scmp.eq.s32.totalorder %s11, 0
    %p73 = por %p71, %p72
    %p74 = scmp.ne.s32.totalorder %s66, %s68
    %p75 = scmp.eq.s32.totalorder %s16, 1
    %p76 = por %p74, %p75
    %p77 = scmp.ne.s32.totalorder %s68, %s69
    %p78 = scmp.eq.s32.totalorder %s16, 0
    %p79 = por %p77, %p78
    %p80 = scmp.ne.s32.totalorder %s68, %s69
    %p81 = scmp.eq.s32.totalorder %s17, 1
    %p82 = por %p80, %p81
    %p84 = scmp.ne.s32.totalorder %s69, %s83
    %p85 = scmp.eq.s32.totalorder %s17, 0
    %p86 = por %p84, %p85
    %s88 = sadd.s32 %s87, 1
    %p91 = scmp.eq.s32.totalorder %s11, 1
    %p92 = scmp.ne.s32.totalorder %s87, %s89
    %p93 = scmp.eq.s32.totalorder %s11, 0
    %p94 = por %p92, %p93
    %p95 = scmp.ne.s32.totalorder %s87, %s89
    %p96 = scmp.eq.s32.totalorder %s16, 1
    %p97 = por %p95, %p96
    %p98 = scmp.ne.s32.totalorder %s89, %s90
    %p99 = scmp.eq.s32.totalorder %s16, 0
    %p100 = por %p98, %p99
    %p101 = scmp.ne.s32.totalorder %s89, %s90
    %p102 = scmp.eq.s32.totalorder %s17, 1
    %p103 = por %p101, %p102
    %p105 = scmp.ne.s32.totalorder %s90, %s104
    %p106 = scmp.eq.s32.totalorder %s17, 0
    %p107 = por %p105, %p106
    %s109 = sadd.s32 %s108, 1
    %p112 = scmp.eq.s32.totalorder %s11, 1
    %p113 = scmp.ne.s32.totalorder %s108, %s110
    %p114 = scmp.eq.s32.totalorder %s11, 0
    %p115 = por %p113, %p114
    %p116 = scmp.ne.s32.totalorder %s108, %s110
    %p117 = scmp.eq.s32.totalorder %s16, 1
    %p118 = por %p116, %p117
    %p119 = scmp.ne.s32.totalorder %s110, %s111
    %p120 = scmp.eq.s32.totalorder %s16, 0
    %p121 = por %p119, %p120
    %p122 = scmp.ne.s32.totalorder %s110, %s111
    %p123 = scmp.eq.s32.totalorder %s17, 1
    %p124 = por %p122, %p123
    %p126 = scmp.ne.s32.totalorder %s111, %s125
    %p127 = scmp.eq.s32.totalorder %s17, 0
    %p128 = por %p126, %p127
    %s129 = ssub.s32 %s11, %s18
    %p130 = scmp.eq.s32.totalorder %s129, 0
    %s132 = sadd.s32 %s131, 1
    %s133 = scalar_select %p130, %s131, %s132
    %p136 = pneg %p130
    %p137 = scmp.eq.s32.totalorder %s11, 1
    %p138 = por %p136, %p137
    %p139 = scmp.ne.s32.totalorder %s131, %s134
    %p140 = scmp.eq.s32.totalorder %s11, 0
    %p141 = por %p139, %p140
    %p142 = scmp.ne.s32.totalorder %s131, %s134
    %p143 = scmp.eq.s32.totalorder %s16, 1
    %p144 = por %p142, %p143
    %p145 = scmp.ne.s32.totalorder %s134, %s135
    %p146 = scmp.eq.s32.totalorder %s16, 0
    %p147 = por %p145, %p146
    %p148 = scmp.ne.s32.totalorder %s134, %s135
    %p149 = scmp.eq.s32.totalorder %s17, 1
    %p150 = por %p148, %p149
    %p152 = scmp.ne.s32.totalorder %s135, %s151
    %p153 = scmp.eq.s32.totalorder %s17, 0
    %p154 = por %p152, %p153
    %p155 = scmp.le.s32.totalorder 1, %s11
    %p156 = scmp.lt.s32.totalorder %s11, 3
    %p157 = pnand %p155, %p156
    %p158 = pneg %p157
    // Predicated region
    $region9: #{res_module_pallas.1} parent=5 // pred_check
      _
    $region10: #{res_module_pallas.1} parent=5 // pred_check_branch
      %160 = sbr.rel (%p157) target = $region12
    $region11: #{res_module_pallas.1} parent=5 // pred_region
      %s161 = ssub.s32 %s11, 1
      // Predicated region
      $region13: #{res_module_pallas.1} parent=11 // pred_check
        %p162 = pneg %p58
      $region14: #{res_module_pallas.1} parent=11 // pred_check_branch
        %164 = sbr.rel (%p162) target = $region16
      $region15: #{res_module_pallas.1} parent=11 // pred_region
        _
      $region16: #{res_module_pallas.1} parent=11 // pred_fallthru
        _
      // Predicated region
      $region17: #{res_module_pallas.1} parent=11 // pred_check
        %p165 = pneg %p79
      $region18: #{res_module_pallas.1} parent=11 // pred_check_branch
        %167 = sbr.rel (%p165) target = $region20
      $region19: #{res_module_pallas.1} parent=11 // pred_region
        _
      $region20: #{res_module_pallas.1} parent=11 // pred_fallthru
        _
      // Predicated region
      $region21: #{res_module_pallas.1} parent=11 // pred_check
        %p168 = pneg %p100
      $region22: #{res_module_pallas.1} parent=11 // pred_check_branch
        %170 = sbr.rel (%p168) target = $region24
      $region23: #{res_module_pallas.1} parent=11 // pred_region
        _
      $region24: #{res_module_pallas.1} parent=11 // pred_fallthru
        _
      // Predicated region
      $region25: #{res_module_pallas.1} parent=11 // pred_check
        %p171 = pneg %p121
      $region26: #{res_module_pallas.1} parent=11 // pred_check_branch
        %173 = sbr.rel (%p171) target = $region28
      $region27: #{res_module_pallas.1} parent=11 // pred_region
        _
      $region28: #{res_module_pallas.1} parent=11 // pred_fallthru
        _
    $region12: #{res_module_pallas.1} parent=5 // pred_fallthru
      _
    %p174 = scmp.lt.s32.totalorder %s11, 2
    // Predicated region
    $region29: #{res_module_pallas.1} parent=5 // pred_check
      %p175 = pneg %p174
    $region30: #{res_module_pallas.1} parent=5 // pred_check_branch
      %177 = sbr.rel (%p175) target = $region32
    $region31: #{res_module_pallas.1} parent=5 // pred_region
      // Predicated region
      $region33: #{res_module_pallas.1} parent=31 // pred_check
        %p178 = pneg %p31
      $region34: #{res_module_pallas.1} parent=31 // pred_check_branch
        %180 = sbr.rel (%p178) target = $region36
      $region35: #{res_module_pallas.1} parent=31 // pred_region
        %p181 = scmp.lt.s32.totalorder %s11, 1
        %s182 = scalar_select %p181, %s11, 1
        %s183 = smul.addr %s182, 2
        %s184 = smul.addr %s183, 4
        %s185 = scalar_lea.vmem %s0, %s184
      $region36: #{res_module_pallas.1} parent=31 // pred_fallthru
        _
    $region32: #{res_module_pallas.1} parent=5 // pred_fallthru
      _
    %p186 = scmp.le.s32.totalorder 1, %s11
    %p187 = scmp.lt.s32.totalorder %s11, 3
    %p188 = pnand %p186, %p187
    %p189 = pneg %p188
    // Predicated region
    $region37: #{res_module_pallas.1} parent=5 // pred_check
      _
    $region38: #{res_module_pallas.1} parent=5 // pred_check_branch
      %191 = sbr.rel (%p188) target = $region40
    $region39: #{res_module_pallas.1} parent=5 // pred_region
      %s192 = ssub.s32 %s11, 1
      %p193 = scmp.lt.s32.totalorder %s16, 1
      %s194 = scalar_select %p193, %s16, 1
      %s195 = smul.addr %s194, 2
      %s196 = smul.addr %s195, 4
      %s197 = scalar_lea.vmem %s0, %s196
      %p198 = pneg %p37
      %p199 = pneg %p34
      %p200 = pneg %p58
      %p201 = pneg %p55
      %p202 = pneg %p79
      %p203 = pneg %p76
      %p204 = pneg %p100
      %p205 = pneg %p97
      %p206 = pneg %p121
      %p207 = pneg %p118
      %p208 = pneg %p147
      %p209 = pneg %p144
      %p210 = scmp.lt.s32.totalorder %s16, 1
      %s211 = scalar_select %p210, %s16, 1
      %s212 = smul.addr %s211, 2
      %s213 = smul.addr %s212, 4
      %s214 = scalar_lea.vmem %s5, %s213
      %p215 = scmp.lt.s32.totalorder %s16, 1
      %s216 = scalar_select %p215, %s16, 1
      %s217 = smul.addr %s216, 2
      %s218 = smul.addr %s217, 4
      %s219 = scalar_lea.vmem %s0, %s218
      %p220 = scmp.lt.s32.totalorder %s16, 1
      %s221 = scalar_select %p220, %s16, 1
      %s222 = smul.addr %s221, 2
      %s223 = smul.addr %s222, 4
      %s224 = scalar_lea.vmem %s5, %s223
      %v228 = vld [vmem:[%s219] sm:$0xff]
      %v229 = vlaneseq
      %v230 = vand.u32 %v229, 127
      %v231 = vadd.s32 %v230, 128
      %vm232 = vcmp.lt.s32.totalorder %v230, 0
      %v233 = vsub.s32 0, %v230
      %v234 = vsel %vm232, %v233, %v230
      %v235 = vshrl.u32 %v234, 4
      %v236 = vand.u32 %v234, 15
      %v237 = vsub.s32 0, %v236
      %v238 = vsel %vm232, %v237, %v236
      %vm239 = vcmp.lt.s32.totalorder %v231, 0
      %v240 = vsub.s32 0, %v231
      %v241 = vsel %vm239, %v240, %v231
      %v242 = vshrl.u32 %v241, 4
      %v243 = vand.u32 %v241, 15
      %v244 = vsub.s32 0, %v243
      %v245 = vsel %vm239, %v244, %v243
      %vm246 = vcmp.ne.s32.totalorder %v238, 0
      %vm247 = vcmp.ne.s32.totalorder %v245, 0
      %vm248 = vcmp.lt.s32.totalorder %v238, 0
      %vm249 = vcmp.lt.s32.totalorder %v245, 0
      %vm250 = vmand %vm248, %vm246
      %vm251 = vmand %vm249, %vm247
      %v252 = vadd.s32 %v238, 16
      %v253 = vadd.s32 %v245, 16
      %v254 = vsel %vm250, %v252, %v238
      %v255 = vsel %vm251, %v253, %v245
      %vm256 = vcmp.eq.s32.totalorder %v254, 0
      %vm257 = vcmp.eq.s32.totalorder %v255, 0
      %vm258 = vcmp.eq.s32.totalorder %v254, 15
      %vm259 = vcmp.eq.s32.totalorder %v255, 15
      %v261 = vcombine.high %v228, %v228
      %v263 = vpack.c.bf16 %v228, %v228
      %v264 = vpack.c.bf16 %v261, %v261
      %267 = vrot.lane.b32.xlu0 %v263, 17
      %v268 = vpop.permute.xlu0 %267
      %269 = vrot.lane.b32.xlu0 %v264, 17
      %v270 = vpop.permute.xlu0 %269
      %vm271 = vcmask 138240
      %v272 = vsel %vm271, %v268, %v270
      %vm274 = vcmask 138240
      %v277 = vsel %vm274, 0, %v268
      %vm279 = vmpackc.low %vm257, %vm256
      %v280 = vsel %vm279, 65537, 0
      %v281 = vlaneseq
      %v282 = vshrl.u32 %v281, 7
      %v283 = vsub.s32 0, %v282
      %v284 = vrot.slane %v280, %v283
      %v285 = vlaneseq
      %v286 = vshrl.u32 %v285, 7
      %v287 = vsub.s32 4, %v286
      %v288 = vrot.slane %v280, %v287
      %vm289 = vcmp.ne.s16.totalorder %v284, 0
      %vm290 = vcmp.ne.s16.totalorder %v288, 0
      %v291 = vsel %vm289, 0, %v277
      %v292 = vsel %vm290, 0, %v272
      %293 = vrot.lane.b32.xlu0 %v263, 16
      %v294 = vpop.permute.xlu0 %293
      %295 = vrot.lane.b32.xlu0 %v264, 16
      %v296 = vpop.permute.xlu0 %295
      %vm297 = vcmask 130048
      %v298 = vsel %vm297, %v294, %v296
      %vm299 = vcmask 130048
      %v301 = vsel %vm299, 0, %v294
      %302 = vrot.lane.b32.xlu0 %v263, 15
      %v303 = vpop.permute.xlu0 %302
      %304 = vrot.lane.b32.xlu0 %v264, 15
      %v305 = vpop.permute.xlu0 %304
      %vm306 = vcmask 121856
      %v307 = vsel %vm306, %v303, %v305
      %vm309 = vcmask 121856
      %v311 = vsel %vm309, 0, %v303
      %vm313 = vmpackc.low %vm259, %vm258
      %v314 = vsel %vm313, 65537, 0
      %v315 = vlaneseq
      %v316 = vshrl.u32 %v315, 7
      %v317 = vsub.s32 0, %v316
      %v318 = vrot.slane %v314, %v317
      %v319 = vlaneseq
      %v320 = vshrl.u32 %v319, 7
      %v321 = vsub.s32 4, %v320
      %v322 = vrot.slane %v314, %v321
      %vm323 = vcmp.ne.s16.totalorder %v318, 0
      %vm324 = vcmp.ne.s16.totalorder %v322, 0
      %v325 = vsel %vm323, 0, %v311
      %v326 = vsel %vm324, 0, %v307
      %327 = vrot.lane.b32.xlu0 %v263, 1
      %v328 = vpop.permute.xlu0 %327
      %329 = vrot.lane.b32.xlu0 %v264, 1
      %v330 = vpop.permute.xlu0 %329
      %vm331 = vcmask 7168
      %v332 = vsel %vm331, %v328, %v330
      %vm334 = vcmask 7168
      %v336 = vsel %vm334, 0, %v328
      %v338 = vsel %vm289, 0, %v336
      %v339 = vsel %vm290, 0, %v332
      %340 = vrot.lane.b32.xlu0 %v263, 127
      %v341 = vpop.permute.xlu0 %340
      %342 = vrot.lane.b32.xlu0 %v264, 127
      %v343 = vpop.permute.xlu0 %342
      %vm344 = vcmask 1039360
      %v345 = vsel %vm344, %v341, %v343
      %vm347 = vcmask 1039360
      %v349 = vsel %vm347, %v343, 0
      %v351 = vsel %vm323, 0, %v345
      %v352 = vsel %vm324, 0, %v349
      %353 = vrot.lane.b32.xlu0 %v263, 113
      %v354 = vpop.permute.xlu0 %353
      %355 = vrot.lane.b32.xlu0 %v264, 113
      %v356 = vpop.permute.xlu0 %355
      %vm357 = vcmask 924672
      %v358 = vsel %vm357, %v354, %v356
      %vm360 = vcmask 924672
      %v362 = vsel %vm360, %v356, 0
      %v364 = vsel %vm289, 0, %v358
      %v365 = vsel %vm290, 0, %v362
      %366 = vrot.lane.b32.xlu0 %v263, 112
      %v367 = vpop.permute.xlu0 %366
      %368 = vrot.lane.b32.xlu0 %v264, 112
      %v369 = vpop.permute.xlu0 %368
      %vm370 = vcmask 916480
      %v371 = vsel %vm370, %v367, %v369
      %vm372 = vcmask 916480
      %v374 = vsel %vm372, %v369, 0
      %375 = vrot.lane.b32.xlu0 %v263, 111
      %v376 = vpop.permute.xlu0 %375
      %377 = vrot.lane.b32.xlu0 %v264, 111
      %v378 = vpop.permute.xlu0 %377
      %vm379 = vcmask 908288
      %v380 = vsel %vm379, %v376, %v378
      %vm382 = vcmask 908288
      %v384 = vsel %vm382, %v378, 0
      %v386 = vsel %vm323, 0, %v380
      %v387 = vsel %vm324, 0, %v384
      %v389 = vrot.slane %v301, 6
      %v390 = vrot.slane %v298, 6
      %v393 = vrot.slane %v325, 4
      %v394 = vrot.slane %v326, 4
      %v397 = vrot.slane %v338, 2
      %v398 = vrot.slane %v339, 2
      %v401 = vrot.slane %v351, 6
      %v402 = vrot.slane %v352, 6
      %v405 = vrot.slane %v364, 4
      %v406 = vrot.slane %v365, 4
      %v408 = vrot.slane %v371, 2
      %v409 = vrot.slane %v374, 2
      %vm410 = vcmask 1041408
      %v413 = vsel %vm410, %v291, %v389
      %v416 = vsel %vm410, %v292, %v390
      %vm417 = vcmask 1043456
      %v419 = vsel %vm417, %v413, %v393
      %v421 = vsel %vm417, %v416, %v394
      %vm422 = vcmask 1045504
      %v424 = vsel %vm422, %v419, %v397
      %v427 = vsel %vm422, %v421, %v398
      %v431 = vsel %vm410, %v263, %v401
      %v434 = vsel %vm410, %v264, %v402
      %v436 = vsel %vm417, %v431, %v405
      %v438 = vsel %vm417, %v434, %v406
      %v440 = vsel %vm422, %v436, %v408
      %v443 = vsel %vm422, %v438, %v409
      %v445 = vld [vmem:[%s1] sm:$0x3]
      %v446 = vld [vmem:[%s2] sm:$0xf]
      %448 = vset.pattern.permute.xlu0 0
      %449 = vperm.xlu0 %448, %v446
      %v450 = vpop.permute.xlu0 %449
      %vm452 = vcmask 293888
      %v454 = vsel %vm452, %v445, 0
      %v457 = vsel %vm410, %v386, 0
      %v460 = vsel %vm410, %v387, 0
      %462 = vmatprep.subr.bf16.mxu0 0
      %463 = vmatpush1.bf16.msra.mxu0 0
      %464 = vmatprep.subr.bf16.mxu0 0
      %465 = vmatpush1.bf16.msra.mxu0 0
      %466 = vmatprep.subr.bf16.mxu0 0
      %467 = vmatpush1.bf16.msra.mxu0 0
      %468 = vmatprep.subr.bf16.mxu0 0
      %469 = vmatpush1.bf16.msra.mxu0 0
      %470 = vmatprep.subr.bf16.mxu0 0
      %471 = vmatpush1.bf16.msra.mxu0 0
      %472 = vmatprep.subr.bf16.mxu0 %v460
      %473 = vmatpush1.bf16.msra.mxu0 %v457
      %474 = vmatprep.subr.bf16.mxu0 %v443
      %475 = vmatpush1.bf16.msra.mxu0 %v440
      %476 = vmatprep.subr.bf16.mxu0 %v427
      %477 = vmatpush1.bf16.msra.mxu0 %v424
      %478 = vmatprep.subr.bf16.mxu0 0
      %479 = vmatpush2.bf16.msra.mxu0 0
      %480 = vmatprep.subr.bf16.mxu0 0
      %481 = vmatpush2.bf16.msra.mxu0 0
      %482 = vmatprep.subr.bf16.mxu0 0
      %483 = vmatpush2.bf16.msra.mxu0 0
      %484 = vmatprep.subr.bf16.mxu0 0
      %485 = vmatpush2.bf16.msra.mxu0 0
      %486 = vmatprep.subr.bf16.mxu0 0
      %487 = vmatpush2.bf16.msra.mxu0 0
      %488 = vmatprep.subr.bf16.mxu0 0
      %489 = vmatpush2.bf16.msra.mxu0 0
      %490 = vmatprep.subr.bf16.mxu0 0
      %491 = vmatpush2.bf16.msra.mxu0 0
      %492 = vmatprep.subr.bf16.mxu0 0
      %493 = vmatpush2.bf16.msra.mxu0 0
      %494 = vmatprep.mubr.bf16.mxu0 0
      %495 = vmatmul.mubr.bf16.gmra.mxu0 %v454
      %v496 = vpop.f32.mrf.mxu0
      %v497 = vadd.f32 %v450, %v496
      %v498 = vpop.f32.mrf.mxu0
      %v499 = vadd.f32 %v450, %v498
      %v500 = vpop.f32.mrf.mxu0
      %v501 = vpop.f32.mrf.mxu0
      %502 = vdwg.mxu0
      %v503 = vmul.f32 %v497, 0.1
      %v504 = vmul.f32 %v499, 0.1
      %v505 = vmax.f32 %v497, %v503
      %v506 = vmax.f32 %v499, %v504
      %v507 = vpack.c.bf16 %v505, %v505
      %v508 = vpack.c.bf16 %v506, %v506
      %511 = vrot.lane.b32.xlu0 %v507, 17
      %v512 = vpop.permute.xlu0 %511
      %513 = vrot.lane.b32.xlu0 %v508, 17
      %v514 = vpop.permute.xlu0 %513
      %v515 = vsel %vm271, %v512, %v514
      %v518 = vsel %vm274, 0, %v512
      %v520 = vsel %vm289, 0, %v518
      %v521 = vsel %vm290, 0, %v515
      %522 = vrot.lane.b32.xlu0 %v507, 16
      %v523 = vpop.permute.xlu0 %522
      %524 = vrot.lane.b32.xlu0 %v508, 16
      %v525 = vpop.permute.xlu0 %524
      %v526 = vsel %vm297, %v523, %v525
      %v528 = vsel %vm299, 0, %v523
      %529 = vrot.lane.b32.xlu0 %v507, 15
      %v530 = vpop.permute.xlu0 %529
      %531 = vrot.lane.b32.xlu0 %v508, 15
      %v532 = vpop.permute.xlu0 %531
      %v533 = vsel %vm306, %v530, %v532
      %v536 = vsel %vm309, 0, %v530
      %v538 = vsel %vm323, 0, %v536
      %v539 = vsel %vm324, 0, %v533
      %540 = vrot.lane.b32.xlu0 %v507, 1
      %v541 = vpop.permute.xlu0 %540
      %542 = vrot.lane.b32.xlu0 %v508, 1
      %v543 = vpop.permute.xlu0 %542
      %v544 = vsel %vm331, %v541, %v543
      %v547 = vsel %vm334, 0, %v541
      %v549 = vsel %vm289, 0, %v547
      %v550 = vsel %vm290, 0, %v544
      %551 = vrot.lane.b32.xlu0 %v507, 127
      %v552 = vpop.permute.xlu0 %551
      %553 = vrot.lane.b32.xlu0 %v508, 127
      %v554 = vpop.permute.xlu0 %553
      %v555 = vsel %vm344, %v552, %v554
      %v558 = vsel %vm347, %v554, 0
      %v560 = vsel %vm323, 0, %v555
      %v561 = vsel %vm324, 0, %v558
      %562 = vrot.lane.b32.xlu0 %v507, 113
      %v563 = vpop.permute.xlu0 %562
      %564 = vrot.lane.b32.xlu0 %v508, 113
      %v565 = vpop.permute.xlu0 %564
      %v566 = vsel %vm357, %v563, %v565
      %v569 = vsel %vm360, %v565, 0
      %v571 = vsel %vm289, 0, %v566
      %v572 = vsel %vm290, 0, %v569
      %573 = vrot.lane.b32.xlu0 %v507, 112
      %v574 = vpop.permute.xlu0 %573
      %575 = vrot.lane.b32.xlu0 %v508, 112
      %v576 = vpop.permute.xlu0 %575
      %v577 = vsel %vm370, %v574, %v576
      %v579 = vsel %vm372, %v576, 0
      %580 = vrot.lane.b32.xlu0 %v507, 111
      %v581 = vpop.permute.xlu0 %580
      %582 = vrot.lane.b32.xlu0 %v508, 111
      %v583 = vpop.permute.xlu0 %582
      %v584 = vsel %vm379, %v581, %v583
      %v587 = vsel %vm382, %v583, 0
      %v589 = vsel %vm323, 0, %v584
      %v590 = vsel %vm324, 0, %v587
      %v592 = vrot.slane %v528, 6
      %v593 = vrot.slane %v526, 6
      %v596 = vrot.slane %v538, 4
      %v597 = vrot.slane %v539, 4
      %v600 = vrot.slane %v549, 2
      %v601 = vrot.slane %v550, 2
      %v604 = vrot.slane %v560, 6
      %v605 = vrot.slane %v561, 6
      %v608 = vrot.slane %v571, 4
      %v609 = vrot.slane %v572, 4
      %v611 = vrot.slane %v577, 2
      %v612 = vrot.slane %v579, 2
      %v615 = vsel %vm410, %v520, %v592
      %v618 = vsel %vm410, %v521, %v593
      %v620 = vsel %vm417, %v615, %v596
      %v622 = vsel %vm417, %v618, %v597
      %v624 = vsel %vm422, %v620, %v600
      %v627 = vsel %vm422, %v622, %v601
      %v631 = vsel %vm410, %v507, %v604
      %v634 = vsel %vm410, %v508, %v605
      %v636 = vsel %vm417, %v631, %v608
      %v638 = vsel %vm417, %v634, %v609
      %v640 = vsel %vm422, %v636, %v611
      %v643 = vsel %vm422, %v638, %v612
      %v645 = vld [vmem:[%s3] sm:$0x3]
      %v646 = vld [vmem:[%s4] sm:$0xf]
      %648 = vset.pattern.permute.xlu0 0
      %649 = vperm.xlu0 %648, %v646
      %v650 = vpop.permute.xlu0 %649
      %v653 = vsel %vm452, %v645, 0
      %v656 = vsel %vm410, %v589, 0
      %v659 = vsel %vm410, %v590, 0
      %661 = vmatprep.subr.bf16.mxu0 0
      %662 = vmatpush1.bf16.msra.mxu0 0
      %663 = vmatprep.subr.bf16.mxu0 0
      %664 = vmatpush1.bf16.msra.mxu0 0
      %665 = vmatprep.subr.bf16.mxu0 0
      %666 = vmatpush1.bf16.msra.mxu0 0
      %667 = vmatprep.subr.bf16.mxu0 0
      %668 = vmatpush1.bf16.msra.mxu0 0
      %669 = vmatprep.subr.bf16.mxu0 0
      %670 = vmatpush1.bf16.msra.mxu0 0
      %671 = vmatprep.subr.bf16.mxu0 %v659
      %672 = vmatpush1.bf16.msra.mxu0 %v656
      %673 = vmatprep.subr.bf16.mxu0 %v643
      %674 = vmatpush1.bf16.msra.mxu0 %v640
      %675 = vmatprep.subr.bf16.mxu0 %v627
      %676 = vmatpush1.bf16.msra.mxu0 %v624
      %677 = vmatprep.subr.bf16.mxu0 0
      %678 = vmatpush2.bf16.msra.mxu0 0
      %679 = vmatprep.subr.bf16.mxu0 0
      %680 = vmatpush2.bf16.msra.mxu0 0
      %681 = vmatprep.subr.bf16.mxu0 0
      %682 = vmatpush2.bf16.msra.mxu0 0
      %683 = vmatprep.subr.bf16.mxu0 0
      %684 = vmatpush2.bf16.msra.mxu0 0
      %685 = vmatprep.subr.bf16.mxu0 0
      %686 = vmatpush2.bf16.msra.mxu0 0
      %687 = vmatprep.subr.bf16.mxu0 0
      %688 = vmatpush2.bf16.msra.mxu0 0
      %689 = vmatprep.subr.bf16.mxu0 0
      %690 = vmatpush2.bf16.msra.mxu0 0
      %691 = vmatprep.subr.bf16.mxu0 0
      %692 = vmatpush2.bf16.msra.mxu0 0
      %693 = vmatprep.mubr.bf16.mxu0 0
      %694 = vmatmul.mubr.bf16.gmra.mxu0 %v653
      %v695 = vpop.f32.mrf.mxu0
      %v696 = vadd.f32 %v650, %v695
      %v697 = vpop.f32.mrf.mxu0
      %v698 = vadd.f32 %v650, %v697
      %v699 = vpop.f32.mrf.mxu0
      %v700 = vpop.f32.mrf.mxu0
      %701 = vdwg.mxu0
      %v704 = vcombine.low %v696, %v698
      %v706 = vadd.f32 %v228, %v704
      %707 = vst [vmem:[%s224] sm:$0xff] %v706
      %p708 = scmp.lt.s32.totalorder %s16, 1
      %s709 = scalar_select %p708, %s16, 1
      %s710 = smul.addr %s709, 2
      %s711 = smul.addr %s710, 4
      %s712 = scalar_lea.vmem %s5, %s711
      // Predicated region
      $region41: #{res_module_pallas.1} parent=39 // pred_check
        %p713 = pneg %p144
      $region42: #{res_module_pallas.1} parent=39 // pred_check_branch
        %715 = sbr.rel (%p713) target = $region44
      $region43: #{res_module_pallas.1} parent=39 // pred_region
        _
      $region44: #{res_module_pallas.1} parent=39 // pred_fallthru
        _
    $region40: #{res_module_pallas.1} parent=5 // pred_fallthru
      _
    %p716 = scmp.le.s32.totalorder 2, %s11
    // Predicated region
    $region45: #{res_module_pallas.1} parent=5 // pred_check
      %p717 = pneg %p716
    $region46: #{res_module_pallas.1} parent=5 // pred_check_branch
      %719 = sbr.rel (%p717) target = $region48
    $region47: #{res_module_pallas.1} parent=5 // pred_region
      %s720 = ssub.s32 %s11, 2
      // Predicated region
      $region49: #{res_module_pallas.1} parent=47 // pred_check
        %p721 = pneg %p150
      $region50: #{res_module_pallas.1} parent=47 // pred_check_branch
        %723 = sbr.rel (%p721) target = $region52
      $region51: #{res_module_pallas.1} parent=47 // pred_region
        %p724 = scmp.lt.s32.totalorder %s17, 1
        %s725 = scalar_select %p724, %s17, 1
        %s726 = smul.addr %s725, 2
        %s727 = smul.addr %s726, 4
        %s728 = scalar_lea.vmem %s5, %s727
      $region52: #{res_module_pallas.1} parent=47 // pred_fallthru
        _
    $region48: #{res_module_pallas.1} parent=5 // pred_fallthru
      _
  $region6: #{res_module_pallas.1} parent=0 // loop_footer
    %s15 = sadd.s32 1, %s11
  $region7: #{res_module_pallas.1} parent=0 // loop_footer_branch
    %10 = sbr.rel target = $region3
  $region8: #{res_module_pallas.1} parent=0 // loop_exit
    _

</llo_original>
